<compile_context>
chip_gen: v7x
topology: tpu7x:2x2x1
jax: 0.10.0
libtpu: 0.0.40
codegen_flags: <defaults>
</compile_context>

<pallas_src>
import functools

import jax
import jax.numpy as jnp
from jax.experimental import pallas as pl
from jax.experimental.pallas import tpu as pltpu


def _attention_kernel(q_ref, k_ref, v_ref,
                      wq_ref, bq_ref, wk_ref, bk_ref, wv_ref, bv_ref,
                      wo_ref, bo_ref,
                      o_ref, acc_ref, *, scale, causal):
    h = pl.program_id(1)

    @pl.when(h == 0)
    def _():
        acc_ref[...] = jnp.zeros_like(acc_ref)

    xq = q_ref[0].astype(jnp.float32)          # (Lq, D)
    xk = k_ref[0].astype(jnp.float32)          # (Lk, D)
    xv = v_ref[0].astype(jnp.float32)          # (Lk, D)

    # Per-head projections (MXU).
    q = jnp.dot(xq, wq_ref[0], preferred_element_type=jnp.float32) + bq_ref[0]   # (Lq, hd)
    k = jnp.dot(xk, wk_ref[0], preferred_element_type=jnp.float32) + bk_ref[0]   # (Lk, hd)
    v = jnp.dot(xv, wv_ref[0], preferred_element_type=jnp.float32) + bv_ref[0]   # (Lk, hd)

    # Scores: contract over head_dim without an explicit transpose.
    s = jax.lax.dot_general(q, k, (((1,), (1,)), ((), ())),
                            preferred_element_type=jnp.float32) * scale          # (Lq, Lk)

    if causal:
        lq, lk = s.shape
        row = jax.lax.broadcasted_iota(jnp.int32, (lq, lk), 0)
        col = jax.lax.broadcasted_iota(jnp.int32, (lq, lk), 1)
        s = jnp.where(col <= row, s, -1e30)

    # Softmax over the src axis.
    s = s - jnp.max(s, axis=-1, keepdims=True)
    p = jnp.exp(s)
    p = p / jnp.sum(p, axis=-1, keepdims=True)

    out_h = jnp.dot(p, v, preferred_element_type=jnp.float32)                    # (Lq, hd)

    # Per-head slice of the output projection, accumulated over heads.
    acc_ref[...] += jnp.dot(out_h, wo_ref[0], preferred_element_type=jnp.float32)  # (Lq, D)

    @pl.when(h == pl.num_programs(1) - 1)
    def _():
        o_ref[0] = (acc_ref[...] + bo_ref[...]).astype(o_ref.dtype)


def attention_forward(query, key, value, params, *, num_heads, mask=False):
    """Pallas implementation of AttentionLayer.forward.

    query: (..., Lq, D); key/value: (..., Lk, D) with matching leading dims.
    params: (wq, bq, wk, bk, wv, bv, wo, bo); weights are (D_in, D_out)
            (i.e. already transposed relative to nn.Linear.weight), biases (D,).
    """
    wq, bq, wk, bk, wv, bv, wo, bo = params
    D = query.shape[-1]
    assert D % num_heads == 0, "model_dim must be divisible by num_heads"
    hd = D // num_heads
    Lq = query.shape[-2]
    Lk = key.shape[-2]
    lead = query.shape[:-2]
    B = 1
    for s in lead:
        B *= s

    q2 = query.reshape(B, Lq, D)
    k2 = key.reshape(B, Lk, D)
    v2 = value.reshape(B, Lk, D)

    # Expose the per-head weight slices as a leading head axis so BlockSpecs
    # keep full (aligned or full-dim) trailing dims.
    wq_h = wq.reshape(D, num_heads, hd).transpose(1, 0, 2)   # (H, D, hd)
    wk_h = wk.reshape(D, num_heads, hd).transpose(1, 0, 2)
    wv_h = wv.reshape(D, num_heads, hd).transpose(1, 0, 2)
    bq_h = bq.reshape(num_heads, 1, hd)
    bk_h = bk.reshape(num_heads, 1, hd)
    bv_h = bv.reshape(num_heads, 1, hd)
    wo_h = wo.reshape(num_heads, hd, D)                      # (H, hd, D)
    bo2 = bo.reshape(1, D)

    scale = 1.0 / float(hd) ** 0.5
    kernel = functools.partial(_attention_kernel, scale=scale, causal=bool(mask))

    w_spec = lambda b, h: (h, 0, 0)
    out = pl.pallas_call(
        kernel,
        out_shape=jax.ShapeDtypeStruct((B, Lq, D), query.dtype),
        grid_spec=pltpu.PrefetchScalarGridSpec(
            num_scalar_prefetch=0,
            grid=(B, num_heads),
            in_specs=[
                pl.BlockSpec((1, Lq, D), lambda b, h: (b, 0, 0)),   # query rows
                pl.BlockSpec((1, Lk, D), lambda b, h: (b, 0, 0)),   # key rows
                pl.BlockSpec((1, Lk, D), lambda b, h: (b, 0, 0)),   # value rows
                pl.BlockSpec((1, D, hd), w_spec),                   # Wq per head
                pl.BlockSpec((1, 1, hd), w_spec),                   # bq per head
                pl.BlockSpec((1, D, hd), w_spec),                   # Wk per head
                pl.BlockSpec((1, 1, hd), w_spec),                   # bk per head
                pl.BlockSpec((1, D, hd), w_spec),                   # Wv per head
                pl.BlockSpec((1, 1, hd), w_spec),                   # bv per head
                pl.BlockSpec((1, hd, D), w_spec),                   # Wo rows per head
                pl.BlockSpec((1, D), lambda b, h: (0, 0)),          # bo
            ],
            out_specs=pl.BlockSpec((1, Lq, D), lambda b, h: (b, 0, 0)),
            scratch_shapes=[pltpu.VMEM((Lq, D), jnp.float32)],
        ),
        compiler_params=pltpu.CompilerParams(
            dimension_semantics=("parallel", "arbitrary"),
        ),
    )(q2, k2, v2, wq_h, bq_h, wk_h, bk_h, wv_h, bv_h, wo_h, bo2)

    return out.reshape(*lead, Lq, D)


def _reference(query, key, value, params, num_heads, mask=False):
    """Pure-JAX reference matching the PyTorch AttentionLayer semantics."""
    wq, bq, wk, bk, wv, bv, wo, bo = params
    P = jax.lax.Precision.HIGHEST
    D = query.shape[-1]
    hd = D // num_heads

    Q = jnp.matmul(query, wq, precision=P) + bq
    K = jnp.matmul(key, wk, precision=P) + bk
    V = jnp.matmul(value, wv, precision=P) + bv

    def split(x):
        return x.reshape(*x.shape[:-1], num_heads, hd)

    Qh, Kh, Vh = split(Q), split(K), split(V)
    s = jnp.einsum("...qhd,...khd->...hqk", Qh, Kh, precision=P) / (hd ** 0.5)
    if mask:
        lq, lk = s.shape[-2], s.shape[-1]
        tri = jnp.tril(jnp.ones((lq, lk), dtype=bool))
        s = jnp.where(tri, s, -jnp.inf)
    p = jax.nn.softmax(s, axis=-1)
    o = jnp.einsum("...hqk,...khd->...qhd", p, Vh, precision=P)
    o = o.reshape(*o.shape[:-2], D)
    return jnp.matmul(o, wo, precision=P) + bo


if __name__ == "__main__":
    key = jax.random.PRNGKey(0)
    batch, in_steps, num_nodes, model_dim, num_heads = 2, 3, 16, 128, 8

    ks = jax.random.split(key, 12)
    q_in = jax.random.normal(ks[0], (batch, in_steps, num_nodes, model_dim), jnp.float32)
    k_in = jax.random.normal(ks[1], (batch, in_steps, num_nodes, model_dim), jnp.float32)
    v_in = jax.random.normal(ks[2], (batch, in_steps, num_nodes, model_dim), jnp.float32)

    wstd = model_dim ** -0.5
    params = (
        jax.random.normal(ks[3], (model_dim, model_dim), jnp.float32) * wstd,   # Wq
        jax.random.normal(ks[4], (model_dim,), jnp.float32) * 0.1,              # bq
        jax.random.normal(ks[5], (model_dim, model_dim), jnp.float32) * wstd,   # Wk
        jax.random.normal(ks[6], (model_dim,), jnp.float32) * 0.1,              # bk
        jax.random.normal(ks[7], (model_dim, model_dim), jnp.float32) * wstd,   # Wv
        jax.random.normal(ks[8], (model_dim,), jnp.float32) * 0.1,              # bv
        jax.random.normal(ks[9], (model_dim, model_dim), jnp.float32) * wstd,   # Wo
        jax.random.normal(ks[10], (model_dim,), jnp.float32) * 0.1,             # bo
    )

    # Unmasked attention (module default: mask=False)
    out = attention_forward(q_in, k_in, v_in, params, num_heads=num_heads, mask=False)
    out = jax.block_until_ready(out)
    ref = _reference(q_in, k_in, v_in, params, num_heads, mask=False)
    assert out.shape == q_in.shape
    assert jnp.allclose(out, ref, atol=1e-3, rtol=1e-3)

    # Causal-masked attention path
    out_m = attention_forward(q_in, k_in, v_in, params, num_heads=num_heads, mask=True)
    out_m = jax.block_until_ready(out_m)
    ref_m = _reference(q_in, k_in, v_in, params, num_heads, mask=True)
    assert jnp.allclose(out_m, ref_m, atol=1e-3, rtol=1e-3)

    print("KERNEL_OK")
</pallas_src>

<mosaic_0001>
module attributes {stable_mosaic.version = 11 : i64} {
  func.func @_attention_kernel(%arg0: i32, %arg1: i32, %arg2: memref<1x16x128xf32, #tpu.memory_space<vmem>>, %arg3: memref<1x16x128xf32, #tpu.memory_space<vmem>>, %arg4: memref<1x16x128xf32, #tpu.memory_space<vmem>>, %arg5: memref<1x128x16xf32, #tpu.memory_space<vmem>>, %arg6: memref<1x1x16xf32, #tpu.memory_space<vmem>>, %arg7: memref<1x128x16xf32, #tpu.memory_space<vmem>>, %arg8: memref<1x1x16xf32, #tpu.memory_space<vmem>>, %arg9: memref<1x128x16xf32, #tpu.memory_space<vmem>>, %arg10: memref<1x1x16xf32, #tpu.memory_space<vmem>>, %arg11: memref<1x16x128xf32, #tpu.memory_space<vmem>>, %arg12: memref<1x128xf32, #tpu.memory_space<vmem>>, %arg13: memref<1x16x128xf32, #tpu.memory_space<vmem>>, %arg14: memref<16x128xf32, #tpu.memory_space<vmem>>) attributes {dimension_semantics = [#tpu.dimension_semantics<parallel>, #tpu.dimension_semantics<arbitrary>], iteration_bounds = array<i64: 6, 8>, scalar_prefetch = 0 : i64, scratch_operands = 1 : i64, tpu.core_type = #tpu.core_type<tc>, window_params = [{transform_indices = @transform_0, window_bounds = array<i64: 1, 16, 128>}, {transform_indices = @transform_1, window_bounds = array<i64: 1, 16, 128>}, {transform_indices = @transform_2, window_bounds = array<i64: 1, 16, 128>}, {transform_indices = @transform_3, window_bounds = array<i64: 1, 128, 16>}, {transform_indices = @transform_4, window_bounds = array<i64: 1, 1, 16>}, {transform_indices = @transform_5, window_bounds = array<i64: 1, 128, 16>}, {transform_indices = @transform_6, window_bounds = array<i64: 1, 1, 16>}, {transform_indices = @transform_7, window_bounds = array<i64: 1, 128, 16>}, {transform_indices = @transform_8, window_bounds = array<i64: 1, 1, 16>}, {transform_indices = @transform_9, window_bounds = array<i64: 1, 16, 128>}, {pipeline_mode = #tpu.pipeline_mode<synchronous>, transform_indices = @transform_10, window_bounds = array<i64: 1, 128>}, {transform_indices = @transform_11, window_bounds = array<i64: 1, 16, 128>}]} {
    %c0_i32 = arith.constant 0 : i32
    %0 = arith.cmpi eq, %arg1, %c0_i32 : i32
    %1 = arith.extui %0 : i1 to i32
    %c0_i32_0 = arith.constant 0 : i32
    %2 = arith.cmpi ne, %1, %c0_i32_0 : i32
    scf.if %2 {
      %cst_43 = arith.constant 0.000000e+00 : f32
      %52 = vector.broadcast %cst_43 : f32 to vector<16x128xf32>
      %c0_44 = arith.constant 0 : index
      %c0_45 = arith.constant 0 : index
      %53 = vector.load %arg14[%c0_44, %c0_45] : memref<16x128xf32, #tpu.memory_space<vmem>>, vector<16x128xf32>
      tpu.vector_store %arg14[%c0_44, %c0_45], %52 {strides = array<i32>} : memref<16x128xf32, #tpu.memory_space<vmem>>, vector<16x128xf32>,
    } else {
    }
    %c0 = arith.constant 0 : index
    %c0_1 = arith.constant 0 : index
    %c0_2 = arith.constant 0 : index
    %3 = vector.load %arg2[%c0, %c0_1, %c0_2] : memref<1x16x128xf32, #tpu.memory_space<vmem>>, vector<1x16x128xf32>
    %4 = vector.shape_cast %3 : vector<1x16x128xf32> to vector<16x128xf32>
    %c0_3 = arith.constant 0 : index
    %c0_4 = arith.constant 0 : index
    %c0_5 = arith.constant 0 : index
    %5 = vector.load %arg3[%c0_3, %c0_4, %c0_5] : memref<1x16x128xf32, #tpu.memory_space<vmem>>, vector<1x16x128xf32>
    %6 = vector.shape_cast %5 : vector<1x16x128xf32> to vector<16x128xf32>
    %c0_6 = arith.constant 0 : index
    %c0_7 = arith.constant 0 : index
    %c0_8 = arith.constant 0 : index
    %7 = vector.load %arg4[%c0_6, %c0_7, %c0_8] : memref<1x16x128xf32, #tpu.memory_space<vmem>>, vector<1x16x128xf32>
    %8 = vector.shape_cast %7 : vector<1x16x128xf32> to vector<16x128xf32>
    %c0_9 = arith.constant 0 : index
    %c0_10 = arith.constant 0 : index
    %c0_11 = arith.constant 0 : index
    %9 = vector.load %arg5[%c0_9, %c0_10, %c0_11] : memref<1x128x16xf32, #tpu.memory_space<vmem>>, vector<1x128x16xf32>
    %10 = vector.shape_cast %9 : vector<1x128x16xf32> to vector<128x16xf32>
    %cst = arith.constant dense<0.000000e+00> : vector<16x16xf32>
    %11 = tpu.matmul %4, %10, %cst {dimension_numbers = #tpu.dot_dimension_numbers<[1], [0], [0], [1], [0, 0, 1, 1], [], []>} : vector<16x128xf32>, vector<128x16xf32>, vector<16x16xf32> -> vector<16x16xf32>
    %c0_12 = arith.constant 0 : index
    %c0_13 = arith.constant 0 : index
    %c0_14 = arith.constant 0 : index
    %12 = vector.load %arg6[%c0_12, %c0_13, %c0_14] : memref<1x1x16xf32, #tpu.memory_space<vmem>>, vector<1x1x16xf32>
    %13 = vector.shape_cast %12 : vector<1x1x16xf32> to vector<1x16xf32>
    %14 = vector.broadcast %13 : vector<1x16xf32> to vector<16x16xf32>
    %15 = arith.addf %11, %14 : vector<16x16xf32>
    %c0_15 = arith.constant 0 : index
    %c0_16 = arith.constant 0 : index
    %c0_17 = arith.constant 0 : index
    %16 = vector.load %arg7[%c0_15, %c0_16, %c0_17] : memref<1x128x16xf32, #tpu.memory_space<vmem>>, vector<1x128x16xf32>
    %17 = vector.shape_cast %16 : vector<1x128x16xf32> to vector<128x16xf32>
    %cst_18 = arith.constant dense<0.000000e+00> : vector<16x16xf32>
    %18 = tpu.matmul %6, %17, %cst_18 {dimension_numbers = #tpu.dot_dimension_numbers<[1], [0], [0], [1], [0, 0, 1, 1], [], []>} : vector<16x128xf32>, vector<128x16xf32>, vector<16x16xf32> -> vector<16x16xf32>
    %c0_19 = arith.constant 0 : index
    %c0_20 = arith.constant 0 : index
    %c0_21 = arith.constant 0 : index
    %19 = vector.load %arg8[%c0_19, %c0_20, %c0_21] : memref<1x1x16xf32, #tpu.memory_space<vmem>>, vector<1x1x16xf32>
    %20 = vector.shape_cast %19 : vector<1x1x16xf32> to vector<1x16xf32>
    %21 = vector.broadcast %20 : vector<1x16xf32> to vector<16x16xf32>
    %22 = arith.addf %18, %21 : vector<16x16xf32>
    %c0_22 = arith.constant 0 : index
    %c0_23 = arith.constant 0 : index
    %c0_24 = arith.constant 0 : index
    %23 = vector.load %arg9[%c0_22, %c0_23, %c0_24] : memref<1x128x16xf32, #tpu.memory_space<vmem>>, vector<1x128x16xf32>
    %24 = vector.shape_cast %23 : vector<1x128x16xf32> to vector<128x16xf32>
    %cst_25 = arith.constant dense<0.000000e+00> : vector<16x16xf32>
    %25 = tpu.matmul %8, %24, %cst_25 {dimension_numbers = #tpu.dot_dimension_numbers<[1], [0], [0], [1], [0, 0, 1, 1], [], []>} : vector<16x128xf32>, vector<128x16xf32>, vector<16x16xf32> -> vector<16x16xf32>
    %c0_26 = arith.constant 0 : index
    %c0_27 = arith.constant 0 : index
    %c0_28 = arith.constant 0 : index
    %26 = vector.load %arg10[%c0_26, %c0_27, %c0_28] : memref<1x1x16xf32, #tpu.memory_space<vmem>>, vector<1x1x16xf32>
    %27 = vector.shape_cast %26 : vector<1x1x16xf32> to vector<1x16xf32>
    %28 = vector.broadcast %27 : vector<1x16xf32> to vector<16x16xf32>
    %29 = arith.addf %25, %28 : vector<16x16xf32>
    %cst_29 = arith.constant dense<0.000000e+00> : vector<16x16xf32>
    %30 = tpu.matmul %15, %22, %cst_29 {dimension_numbers = #tpu.dot_dimension_numbers<[1], [1], [0], [0], [0, 0, 1, 0], [], []>} : vector<16x16xf32>, vector<16x16xf32>, vector<16x16xf32> -> vector<16x16xf32>
    %cst_30 = arith.constant 2.500000e-01 : f32
    %31 = vector.broadcast %cst_30 : f32 to vector<16x16xf32>
    %32 = arith.mulf %30, %31 : vector<16x16xf32>
    %cst_31 = arith.constant dense<0xFF800000> : vector<16xf32>
    %33 = vector.multi_reduction <maximumf>, %32, %cst_31 [1] : vector<16x16xf32> to vector<16xf32>
    %34 = vector.shape_cast %33 : vector<16xf32> to vector<16x1xf32>
    %35 = vector.broadcast %34 : vector<16x1xf32> to vector<16x16xf32>
    %36 = arith.subf %32, %35 : vector<16x16xf32>
    %37 = math.exp %36 : vector<16x16xf32>
    %cst_32 = arith.constant dense<0.000000e+00> : vector<16xf32>
    %38 = vector.multi_reduction <add>, %37, %cst_32 [1] : vector<16x16xf32> to vector<16xf32>
    %39 = vector.shape_cast %38 : vector<16xf32> to vector<16x1xf32>
    %40 = vector.broadcast %39 : vector<16x1xf32> to vector<16x16xf32>
    %41 = arith.divf %37, %40 : vector<16x16xf32>
    %cst_33 = arith.constant dense<0.000000e+00> : vector<16x16xf32>
    %42 = tpu.matmul %41, %29, %cst_33 {dimension_numbers = #tpu.dot_dimension_numbers<[1], [0], [0], [1], [0, 0, 1, 1], [], []>} : vector<16x16xf32>, vector<16x16xf32>, vector<16x16xf32> -> vector<16x16xf32>
    %c0_34 = arith.constant 0 : index
    %c0_35 = arith.constant 0 : index
    %43 = vector.load %arg14[%c0_34, %c0_35] : memref<16x128xf32, #tpu.memory_space<vmem>>, vector<16x128xf32>
    %c0_36 = arith.constant 0 : index
    %c0_37 = arith.constant 0 : index
    %c0_38 = arith.constant 0 : index
    %44 = vector.load %arg11[%c0_36, %c0_37, %c0_38] : memref<1x16x128xf32, #tpu.memory_space<vmem>>, vector<1x16x128xf32>
    %45 = vector.shape_cast %44 : vector<1x16x128xf32> to vector<16x128xf32>
    %cst_39 = arith.constant dense<0.000000e+00> : vector<16x128xf32>
    %46 = tpu.matmul %42, %45, %cst_39 {dimension_numbers = #tpu.dot_dimension_numbers<[1], [0], [0], [1], [0, 0, 1, 1], [], []>} : vector<16x16xf32>, vector<16x128xf32>, vector<16x128xf32> -> vector<16x128xf32>
    %47 = arith.addf %43, %46 : vector<16x128xf32>
    %c0_40 = arith.constant 0 : index
    %c0_41 = arith.constant 0 : index
    %48 = vector.load %arg14[%c0_40, %c0_41] : memref<16x128xf32, #tpu.memory_space<vmem>>, vector<16x128xf32>
    tpu.vector_store %arg14[%c0_40, %c0_41], %47 {strides = array<i32>} : memref<16x128xf32, #tpu.memory_space<vmem>>, vector<16x128xf32>,
    %c7_i32 = arith.constant 7 : i32
    %49 = arith.cmpi eq, %arg1, %c7_i32 : i32
    %50 = arith.extui %49 : i1 to i32
    %c0_i32_42 = arith.constant 0 : i32
    %51 = arith.cmpi ne, %50, %c0_i32_42 : i32
    scf.if %51 {
      %c0_43 = arith.constant 0 : index
      %c0_44 = arith.constant 0 : index
      %52 = vector.load %arg14[%c0_43, %c0_44] : memref<16x128xf32, #tpu.memory_space<vmem>>, vector<16x128xf32>
      %c0_45 = arith.constant 0 : index
      %c0_46 = arith.constant 0 : index
      %53 = vector.load %arg12[%c0_45, %c0_46] : memref<1x128xf32, #tpu.memory_space<vmem>>, vector<1x128xf32>
      %54 = vector.broadcast %53 : vector<1x128xf32> to vector<16x128xf32>
      %55 = arith.addf %52, %54 : vector<16x128xf32>
      %c0_47 = arith.constant 0 : index
      %c0_48 = arith.constant 0 : index
      %c0_49 = arith.constant 0 : index
      %56 = vector.load %arg13[%c0_47, %c0_48, %c0_49] : memref<1x16x128xf32, #tpu.memory_space<vmem>>, vector<1x16x128xf32>
      %57 = vector.shape_cast %56 : vector<1x16x128xf32> to vector<16x128xf32>
      %58 = vector.shape_cast %55 : vector<16x128xf32> to vector<1x16x128xf32>
      tpu.vector_store %arg13[%c0_47, %c0_48, %c0_49], %58 {strides = array<i32>} : memref<1x16x128xf32, #tpu.memory_space<vmem>>, vector<1x16x128xf32>,
    } else {
    }
    return
  }
  func.func @transform_0(%arg0: i32, %arg1: i32) -> (i32, i32, i32) {
    %c0_i32 = arith.constant 0 : i32
    %c0_i32_0 = arith.constant 0 : i32
    %c0_i32_1 = arith.constant 0 : i32
    return %arg0, %c0_i32, %c0_i32_0 : i32, i32, i32
  }
  func.func @transform_1(%arg0: i32, %arg1: i32) -> (i32, i32, i32) {
    %c0_i32 = arith.constant 0 : i32
    %c0_i32_0 = arith.constant 0 : i32
    %c0_i32_1 = arith.constant 0 : i32
    return %arg0, %c0_i32, %c0_i32_0 : i32, i32, i32
  }
  func.func @transform_2(%arg0: i32, %arg1: i32) -> (i32, i32, i32) {
    %c0_i32 = arith.constant 0 : i32
    %c0_i32_0 = arith.constant 0 : i32
    %c0_i32_1 = arith.constant 0 : i32
    return %arg0, %c0_i32, %c0_i32_0 : i32, i32, i32
  }
  func.func @transform_3(%arg0: i32, %arg1: i32) -> (i32, i32, i32) {
    %c0_i32 = arith.constant 0 : i32
    %c0_i32_0 = arith.constant 0 : i32
    %c0_i32_1 = arith.constant 0 : i32
    return %arg1, %c0_i32, %c0_i32_0 : i32, i32, i32
  }
  func.func @transform_4(%arg0: i32, %arg1: i32) -> (i32, i32, i32) {
    %c0_i32 = arith.constant 0 : i32
    %c0_i32_0 = arith.constant 0 : i32
    %c0_i32_1 = arith.constant 0 : i32
    return %arg1, %c0_i32, %c0_i32_0 : i32, i32, i32
  }
  func.func @transform_5(%arg0: i32, %arg1: i32) -> (i32, i32, i32) {
    %c0_i32 = arith.constant 0 : i32
    %c0_i32_0 = arith.constant 0 : i32
    %c0_i32_1 = arith.constant 0 : i32
    return %arg1, %c0_i32, %c0_i32_0 : i32, i32, i32
  }
  func.func @transform_6(%arg0: i32, %arg1: i32) -> (i32, i32, i32) {
    %c0_i32 = arith.constant 0 : i32
    %c0_i32_0 = arith.constant 0 : i32
    %c0_i32_1 = arith.constant 0 : i32
    return %arg1, %c0_i32, %c0_i32_0 : i32, i32, i32
  }
  func.func @transform_7(%arg0: i32, %arg1: i32) -> (i32, i32, i32) {
    %c0_i32 = arith.constant 0 : i32
    %c0_i32_0 = arith.constant 0 : i32
    %c0_i32_1 = arith.constant 0 : i32
    return %arg1, %c0_i32, %c0_i32_0 : i32, i32, i32
  }
  func.func @transform_8(%arg0: i32, %arg1: i32) -> (i32, i32, i32) {
    %c0_i32 = arith.constant 0 : i32
    %c0_i32_0 = arith.constant 0 : i32
    %c0_i32_1 = arith.constant 0 : i32
    return %arg1, %c0_i32, %c0_i32_0 : i32, i32, i32
  }
  func.func @transform_9(%arg0: i32, %arg1: i32) -> (i32, i32, i32) {
    %c0_i32 = arith.constant 0 : i32
    %c0_i32_0 = arith.constant 0 : i32
    %c0_i32_1 = arith.constant 0 : i32
    return %arg1, %c0_i32, %c0_i32_0 : i32, i32, i32
  }
  func.func @transform_10(%arg0: i32, %arg1: i32) -> (i32, i32) {
    %c0_i32 = arith.constant 0 : i32
    %c0_i32_0 = arith.constant 0 : i32
    %c0_i32_1 = arith.constant 0 : i32
    return %c0_i32, %c0_i32_0 : i32, i32
  }
  func.func @transform_11(%arg0: i32, %arg1: i32) -> (i32, i32, i32) {
    %c0_i32 = arith.constant 0 : i32
    %c0_i32_0 = arith.constant 0 : i32
    %c0_i32_1 = arith.constant 0 : i32
    return %arg0, %c0_i32, %c0_i32_0 : i32, i32, i32
  }
}

</mosaic_0001>

<llo_original>
// kernel: tpu_custom_call.1
$region0: #{tpu_custom_call.1}
  #allocation0 [shape = 'u32[]', space=smem, size = 0x4, offset = 0x4, fixed_abs, tag = 'smem constant byte address 0x4 - core index']
  #allocation1 [shape = 'u32[144,128]{1,0:T(1,128)}', space=vmem, size = 0x12000, scoped, tag = 'internal scratch']
  #allocation2 [shape = 'f32[16,128]{1,0:T(8,128)}', space=vmem, size = 0x2000, scoped, tag = 'scratch operand']
  %s0 = inlined_call_operand.vmem [shape: f32[6,16,128], index: 0, kind: input, shape index: {}]
  %s1 = inlined_call_operand.vmem [shape: f32[6,16,128], index: 1, kind: input, shape index: {}]
  %s2 = inlined_call_operand.vmem [shape: f32[6,16,128], index: 2, kind: input, shape index: {}]
  %s3 = inlined_call_operand.vmem [shape: f32[8,128,16], index: 3, kind: input, shape index: {}]
  %s4 = inlined_call_operand.vmem [shape: f32[8,1,16], index: 4, kind: input, shape index: {}]
  %s5 = inlined_call_operand.vmem [shape: f32[8,128,16], index: 5, kind: input, shape index: {}]
  %s6 = inlined_call_operand.vmem [shape: f32[8,1,16], index: 6, kind: input, shape index: {}]
  %s7 = inlined_call_operand.vmem [shape: f32[8,128,16], index: 7, kind: input, shape index: {}]
  %s8 = inlined_call_operand.vmem [shape: f32[8,1,16], index: 8, kind: input, shape index: {}]
  %s9 = inlined_call_operand.vmem [shape: f32[8,16,128], index: 9, kind: input, shape index: {}]
  %s10 = inlined_call_operand.vmem [shape: f32[1,128], index: 10, kind: input, shape index: {}]
  %s11 = inlined_call_operand.hbm [shape: f32[6,16,128], index: 11, kind: output, shape index: {}]
  %s12 = sld [smem:[#allocation0]]
  $region85: #{tpu_custom_call.1} parent=0
    _
  %s14 = ssub.s32 1, %s12
  %s15 = scalar_select 0, %s14, %s12
  $region1: #{tpu_custom_call.1} parent=0
    #allocation3 [shape = 'u8[16384]{0}', space=vmem, size = 0x4000, scoped, tag = 'output window, operand 0']
    #allocation4 [shape = 's32[2]{0}', space=sflag, size = 0x8, scoped, tag = 'scoped memory for tpu_custom_call.1']
    %16 = vsyncpa [#allocation4], 0
    %s17 = scalar_lea.sflag [#allocation4], 1
    %18 = vsyncpa %s17, 0
    loop: start=0, step=1, limit=50
    $region2: #{tpu_custom_call.1} parent=1 // loop_pre_header
      _
    $region3: #{tpu_custom_call.1} parent=1 // loop_header
      %s20 = sphi 0, %s24
      %p21 = scmp.ge.s32.totalorder %s20, 50
      %s27 = sphi 0, %s39
      %s28 = sphi 0, %s35
      %s29 = sphi 0, %s27
      %s30 = sphi 0, %s28
      %s31 = sphi 0, %s29
      %s32 = sphi 0, %s30
      %s42 = sphi 0, %s44
      %s45 = sphi 0, %s42
      %s46 = sphi 0, %s45
      %s62 = sphi 0, %s46
      %s68 = sphi 0, %s70
      %s71 = sphi 0, %s68
      %s72 = sphi 0, %s71
      %s88 = sphi 0, %s72
      %s94 = sphi 0, %s96
      %s97 = sphi 0, %s94
      %s98 = sphi 0, %s97
      %s114 = sphi 0, %s98
      %s120 = sphi 0, %s122
      %s123 = sphi 0, %s120
      %s124 = sphi 0, %s123
      %s140 = sphi 0, %s124
      %s146 = sphi 0, %s148
      %s149 = sphi 0, %s146
      %s150 = sphi 0, %s149
      %s166 = sphi 0, %s150
      %s172 = sphi 0, %s174
      %s175 = sphi 0, %s172
      %s176 = sphi 0, %s175
      %s192 = sphi 0, %s176
      %s198 = sphi 0, %s200
      %s201 = sphi 0, %s198
      %s202 = sphi 0, %s201
      %s218 = sphi 0, %s202
      %s224 = sphi 0, %s226
      %s227 = sphi 0, %s224
      %s228 = sphi 0, %s227
      %s244 = sphi 0, %s228
      %s250 = sphi 0, %s252
      %s253 = sphi 0, %s250
      %s254 = sphi 0, %s253
      %s270 = sphi 0, %s254
      %s276 = sphi 0, %s278
      %s279 = sphi 0, %s276
      %s280 = sphi 0, %s279
      %s296 = sphi 0, %s280
      %s300 = sphi 0, %s300
      %s302 = sphi 0, %s300
      %s303 = sphi 0, %s302
      %s317 = sphi 0, %s303
      %s323 = sphi 0, %s325
      %s326 = sphi 0, %s323
      %s327 = sphi 0, %s326
      %s343 = sphi 0, %s327
    $region4: #{tpu_custom_call.1} parent=1 // loop_header_branch
      %23 = sbr.rel (%p21) target = $region8
    $region5: #{tpu_custom_call.1} parent=1 // loop_body
      %s25 = ssub.s32 %s20, 1
      %s26 = ssub.s32 %s20, 2
      %s33 = sadd.s32 1, %s28
      %p34 = scmp.ge.s32.totalorder %s33, 8
      %s35 = scalar_select %p34, 0, %s33
      %s36 = sadd.s32 1, %s27
      %s37 = scalar_select %p34, %s36, %s27
      %p38 = scmp.ge.s32.totalorder %s37, 6
      %s39 = scalar_select %p38, 0, %s37
      %s40 = ssub.s32 %s27, %s39
      %p41 = scmp.eq.s32.totalorder %s40, 0
      %s43 = sadd.s32 %s42, 1
      %s44 = scalar_select %p41, %s42, %s43
      %p47 = pneg %p41
      %p48 = scmp.eq.s32.totalorder %s20, 47
      %p49 = por %p47, %p48
      %p50 = scmp.ne.s32.totalorder %s42, %s45
      %p51 = scmp.eq.s32.totalorder %s20, 0
      %p52 = por %p50, %p51
      %p53 = scmp.ne.s32.totalorder %s42, %s45
      %p54 = scmp.eq.s32.totalorder %s25, 47
      %p55 = por %p53, %p54
      %p56 = scmp.ne.s32.totalorder %s45, %s46
      %p57 = scmp.eq.s32.totalorder %s25, 0
      %p58 = por %p56, %p57
      %p59 = scmp.ne.s32.totalorder %s45, %s46
      %p60 = scmp.eq.s32.totalorder %s26, 47
      %p61 = por %p59, %p60
      %p63 = scmp.ne.s32.totalorder %s46, %s62
      %p64 = scmp.eq.s32.totalorder %s26, 0
      %p65 = por %p63, %p64
      %s66 = ssub.s32 %s27, %s39
      %p67 = scmp.eq.s32.totalorder %s66, 0
      %s69 = sadd.s32 %s68, 1
      %s70 = scalar_select %p67, %s68, %s69
      %p73 = pneg %p67
      %p74 = scmp.eq.s32.totalorder %s20, 47
      %p75 = por %p73, %p74
      %p76 = scmp.ne.s32.totalorder %s68, %s71
      %p77 = scmp.eq.s32.totalorder %s20, 0
      %p78 = por %p76, %p77
      %p79 = scmp.ne.s32.totalorder %s68, %s71
      %p80 = scmp.eq.s32.totalorder %s25, 47
      %p81 = por %p79, %p80
      %p82 = scmp.ne.s32.totalorder %s71, %s72
      %p83 = scmp.eq.s32.totalorder %s25, 0
      %p84 = por %p82, %p83
      %p85 = scmp.ne.s32.totalorder %s71, %s72
      %p86 = scmp.eq.s32.totalorder %s26, 47
      %p87 = por %p85, %p86
      %p89 = scmp.ne.s32.totalorder %s72, %s88
      %p90 = scmp.eq.s32.totalorder %s26, 0
      %p91 = por %p89, %p90
      %s92 = ssub.s32 %s27, %s39
      %p93 = scmp.eq.s32.totalorder %s92, 0
      %s95 = sadd.s32 %s94, 1
      %s96 = scalar_select %p93, %s94, %s95
      %p99 = pneg %p93
      %p100 = scmp.eq.s32.totalorder %s20, 47
      %p101 = por %p99, %p100
      %p102 = scmp.ne.s32.totalorder %s94, %s97
      %p103 = scmp.eq.s32.totalorder %s20, 0
      %p104 = por %p102, %p103
      %p105 = scmp.ne.s32.totalorder %s94, %s97
      %p106 = scmp.eq.s32.totalorder %s25, 47
      %p107 = por %p105, %p106
      %p108 = scmp.ne.s32.totalorder %s97, %s98
      %p109 = scmp.eq.s32.totalorder %s25, 0
      %p110 = por %p108, %p109
      %p111 = scmp.ne.s32.totalorder %s97, %s98
      %p112 = scmp.eq.s32.totalorder %s26, 47
      %p113 = por %p111, %p112
      %p115 = scmp.ne.s32.totalorder %s98, %s114
      %p116 = scmp.eq.s32.totalorder %s26, 0
      %p117 = por %p115, %p116
      %s118 = ssub.s32 %s28, %s35
      %p119 = scmp.eq.s32.totalorder %s118, 0
      %s121 = sadd.s32 %s120, 1
      %s122 = scalar_select %p119, %s120, %s121
      %p125 = pneg %p119
      %p126 = scmp.eq.s32.totalorder %s20, 47
      %p127 = por %p125, %p126
      %p128 = scmp.ne.s32.totalorder %s120, %s123
      %p129 = scmp.eq.s32.totalorder %s20, 0
      %p130 = por %p128, %p129
      %p131 = scmp.ne.s32.totalorder %s120, %s123
      %p132 = scmp.eq.s32.totalorder %s25, 47
      %p133 = por %p131, %p132
      %p134 = scmp.ne.s32.totalorder %s123, %s124
      %p135 = scmp.eq.s32.totalorder %s25, 0
      %p136 = por %p134, %p135
      %p137 = scmp.ne.s32.totalorder %s123, %s124
      %p138 = scmp.eq.s32.totalorder %s26, 47
      %p139 = por %p137, %p138
      %p141 = scmp.ne.s32.totalorder %s124, %s140
      %p142 = scmp.eq.s32.totalorder %s26, 0
      %p143 = por %p141, %p142
      %s144 = ssub.s32 %s28, %s35
      %p145 = scmp.eq.s32.totalorder %s144, 0
      %s147 = sadd.s32 %s146, 1
      %s148 = scalar_select %p145, %s146, %s147
      %p151 = pneg %p145
      %p152 = scmp.eq.s32.totalorder %s20, 47
      %p153 = por %p151, %p152
      %p154 = scmp.ne.s32.totalorder %s146, %s149
      %p155 = scmp.eq.s32.totalorder %s20, 0
      %p156 = por %p154, %p155
      %p157 = scmp.ne.s32.totalorder %s146, %s149
      %p158 = scmp.eq.s32.totalorder %s25, 47
      %p159 = por %p157, %p158
      %p160 = scmp.ne.s32.totalorder %s149, %s150
      %p161 = scmp.eq.s32.totalorder %s25, 0
      %p162 = por %p160, %p161
      %p163 = scmp.ne.s32.totalorder %s149, %s150
      %p164 = scmp.eq.s32.totalorder %s26, 47
      %p165 = por %p163, %p164
      %p167 = scmp.ne.s32.totalorder %s150, %s166
      %p168 = scmp.eq.s32.totalorder %s26, 0
      %p169 = por %p167, %p168
      %s170 = ssub.s32 %s28, %s35
      %p171 = scmp.eq.s32.totalorder %s170, 0
      %s173 = sadd.s32 %s172, 1
      %s174 = scalar_select %p171, %s172, %s173
      %p177 = pneg %p171
      %p178 = scmp.eq.s32.totalorder %s20, 47
      %p179 = por %p177, %p178
      %p180 = scmp.ne.s32.totalorder %s172, %s175
      %p181 = scmp.eq.s32.totalorder %s20, 0
      %p182 = por %p180, %p181
      %p183 = scmp.ne.s32.totalorder %s172, %s175
      %p184 = scmp.eq.s32.totalorder %s25, 47
      %p185 = por %p183, %p184
      %p186 = scmp.ne.s32.totalorder %s175, %s176
      %p187 = scmp.eq.s32.totalorder %s25, 0
      %p188 = por %p186, %p187
      %p189 = scmp.ne.s32.totalorder %s175, %s176
      %p190 = scmp.eq.s32.totalorder %s26, 47
      %p191 = por %p189, %p190
      %p193 = scmp.ne.s32.totalorder %s176, %s192
      %p194 = scmp.eq.s32.totalorder %s26, 0
      %p195 = por %p193, %p194
      %s196 = ssub.s32 %s28, %s35
      %p197 = scmp.eq.s32.totalorder %s196, 0
      %s199 = sadd.s32 %s198, 1
      %s200 = scalar_select %p197, %s198, %s199
      %p203 = pneg %p197
      %p204 = scmp.eq.s32.totalorder %s20, 47
      %p205 = por %p203, %p204
      %p206 = scmp.ne.s32.totalorder %s198, %s201
      %p207 = scmp.eq.s32.totalorder %s20, 0
      %p208 = por %p206, %p207
      %p209 = scmp.ne.s32.totalorder %s198, %s201
      %p210 = scmp.eq.s32.totalorder %s25, 47
      %p211 = por %p209, %p210
      %p212 = scmp.ne.s32.totalorder %s201, %s202
      %p213 = scmp.eq.s32.totalorder %s25, 0
      %p214 = por %p212, %p213
      %p215 = scmp.ne.s32.totalorder %s201, %s202
      %p216 = scmp.eq.s32.totalorder %s26, 47
      %p217 = por %p215, %p216
      %p219 = scmp.ne.s32.totalorder %s202, %s218
      %p220 = scmp.eq.s32.totalorder %s26, 0
      %p221 = por %p219, %p220
      %s222 = ssub.s32 %s28, %s35
      %p223 = scmp.eq.s32.totalorder %s222, 0
      %s225 = sadd.s32 %s224, 1
      %s226 = scalar_select %p223, %s224, %s225
      %p229 = pneg %p223
      %p230 = scmp.eq.s32.totalorder %s20, 47
      %p231 = por %p229, %p230
      %p232 = scmp.ne.s32.totalorder %s224, %s227
      %p233 = scmp.eq.s32.totalorder %s20, 0
      %p234 = por %p232, %p233
      %p235 = scmp.ne.s32.totalorder %s224, %s227
      %p236 = scmp.eq.s32.totalorder %s25, 47
      %p237 = por %p235, %p236
      %p238 = scmp.ne.s32.totalorder %s227, %s228
      %p239 = scmp.eq.s32.totalorder %s25, 0
      %p240 = por %p238, %p239
      %p241 = scmp.ne.s32.totalorder %s227, %s228
      %p242 = scmp.eq.s32.totalorder %s26, 47
      %p243 = por %p241, %p242
      %p245 = scmp.ne.s32.totalorder %s228, %s244
      %p246 = scmp.eq.s32.totalorder %s26, 0
      %p247 = por %p245, %p246
      %s248 = ssub.s32 %s28, %s35
      %p249 = scmp.eq.s32.totalorder %s248, 0
      %s251 = sadd.s32 %s250, 1
      %s252 = scalar_select %p249, %s250, %s251
      %p255 = pneg %p249
      %p256 = scmp.eq.s32.totalorder %s20, 47
      %p257 = por %p255, %p256
      %p258 = scmp.ne.s32.totalorder %s250, %s253
      %p259 = scmp.eq.s32.totalorder %s20, 0
      %p260 = por %p258, %p259
      %p261 = scmp.ne.s32.totalorder %s250, %s253
      %p262 = scmp.eq.s32.totalorder %s25, 47
      %p263 = por %p261, %p262
      %p264 = scmp.ne.s32.totalorder %s253, %s254
      %p265 = scmp.eq.s32.totalorder %s25, 0
      %p266 = por %p264, %p265
      %p267 = scmp.ne.s32.totalorder %s253, %s254
      %p268 = scmp.eq.s32.totalorder %s26, 47
      %p269 = por %p267, %p268
      %p271 = scmp.ne.s32.totalorder %s254, %s270
      %p272 = scmp.eq.s32.totalorder %s26, 0
      %p273 = por %p271, %p272
      %s274 = ssub.s32 %s28, %s35
      %p275 = scmp.eq.s32.totalorder %s274, 0
      %s277 = sadd.s32 %s276, 1
      %s278 = scalar_select %p275, %s276, %s277
      %p281 = pneg %p275
      %p282 = scmp.eq.s32.totalorder %s20, 47
      %p283 = por %p281, %p282
      %p284 = scmp.ne.s32.totalorder %s276, %s279
      %p285 = scmp.eq.s32.totalorder %s20, 0
      %p286 = por %p284, %p285
      %p287 = scmp.ne.s32.totalorder %s276, %s279
      %p288 = scmp.eq.s32.totalorder %s25, 47
      %p289 = por %p287, %p288
      %p290 = scmp.ne.s32.totalorder %s279, %s280
      %p291 = scmp.eq.s32.totalorder %s25, 0
      %p292 = por %p290, %p291
      %p293 = scmp.ne.s32.totalorder %s279, %s280
      %p294 = scmp.eq.s32.totalorder %s26, 47
      %p295 = por %p293, %p294
      %p297 = scmp.ne.s32.totalorder %s280, %s296
      %p298 = scmp.eq.s32.totalorder %s26, 0
      %p299 = por %p297, %p298
      %s301 = sadd.s32 %s300, 1
      %p304 = scmp.eq.s32.totalorder %s20, 47
      %p305 = scmp.ne.s32.totalorder %s300, %s302
      %p306 = scmp.eq.s32.totalorder %s20, 0
      %p307 = por %p305, %p306
      %p308 = scmp.ne.s32.totalorder %s300, %s302
      %p309 = scmp.eq.s32.totalorder %s25, 47
      %p310 = por %p308, %p309
      %p311 = scmp.ne.s32.totalorder %s302, %s303
      %p312 = scmp.eq.s32.totalorder %s25, 0
      %p313 = por %p311, %p312
      %p314 = scmp.ne.s32.totalorder %s302, %s303
      %p315 = scmp.eq.s32.totalorder %s26, 47
      %p316 = por %p314, %p315
      %p318 = scmp.ne.s32.totalorder %s303, %s317
      %p319 = scmp.eq.s32.totalorder %s26, 0
      %p320 = por %p318, %p319
      %s321 = ssub.s32 %s27, %s39
      %p322 = scmp.eq.s32.totalorder %s321, 0
      %s324 = sadd.s32 %s323, 1
      %s325 = scalar_select %p322, %s323, %s324
      %p328 = pneg %p322
      %p329 = scmp.eq.s32.totalorder %s20, 47
      %p330 = por %p328, %p329
      %p331 = scmp.ne.s32.totalorder %s323, %s326
      %p332 = scmp.eq.s32.totalorder %s20, 0
      %p333 = por %p331, %p332
      %p334 = scmp.ne.s32.totalorder %s323, %s326
      %p335 = scmp.eq.s32.totalorder %s25, 47
      %p336 = por %p334, %p335
      %p337 = scmp.ne.s32.totalorder %s326, %s327
      %p338 = scmp.eq.s32.totalorder %s25, 0
      %p339 = por %p337, %p338
      %p340 = scmp.ne.s32.totalorder %s326, %s327
      %p341 = scmp.eq.s32.totalorder %s26, 47
      %p342 = por %p340, %p341
      %p344 = scmp.ne.s32.totalorder %s327, %s343
      %p345 = scmp.eq.s32.totalorder %s26, 0
      %p346 = por %p344, %p345
      %p347 = scmp.le.s32.totalorder 1, %s20
      %p348 = scmp.lt.s32.totalorder %s20, 49
      %p349 = pnand %p347, %p348
      %p350 = pneg %p349
      // Predicated region
      $region9: #{tpu_custom_call.1} parent=5 // pred_check
        _
      $region10: #{tpu_custom_call.1} parent=5 // pred_check_branch
        %352 = sbr.rel (%p349) target = $region12
      $region11: #{tpu_custom_call.1} parent=5 // pred_region
        %s353 = ssub.s32 %s20, 1
        // Predicated region
        $region13: #{tpu_custom_call.1} parent=11 // pred_check
          %p354 = pneg %p313
        $region14: #{tpu_custom_call.1} parent=11 // pred_check_branch
          %356 = sbr.rel (%p354) target = $region16
        $region15: #{tpu_custom_call.1} parent=11 // pred_region
          _
        $region16: #{tpu_custom_call.1} parent=11 // pred_fallthru
          _
      $region12: #{tpu_custom_call.1} parent=5 // pred_fallthru
        _
      %p357 = scmp.lt.s32.totalorder %s20, 48
      // Predicated region
      $region17: #{tpu_custom_call.1} parent=5 // pred_check
        %p358 = pneg %p357
      $region18: #{tpu_custom_call.1} parent=5 // pred_check_branch
        %360 = sbr.rel (%p358) target = $region20
      $region19: #{tpu_custom_call.1} parent=5 // pred_region
        // Predicated region
        $region21: #{tpu_custom_call.1} parent=19 // pred_check
          %p361 = pneg %p52
        $region22: #{tpu_custom_call.1} parent=19 // pred_check_branch
          %363 = sbr.rel (%p361) target = $region24
        $region23: #{tpu_custom_call.1} parent=19 // pred_region
          %p364 = scmp.lt.s32.totalorder %s27, 5
          %s365 = scalar_select %p364, %s27, 5
          %s366 = smul.addr %s365, 2
          %s367 = smul.addr %s366, 8
          %s368 = scalar_lea.vmem %s0, %s367
        $region24: #{tpu_custom_call.1} parent=19 // pred_fallthru
          _
        // Predicated region
        $region25: #{tpu_custom_call.1} parent=19 // pred_check
          %p369 = pneg %p78
        $region26: #{tpu_custom_call.1} parent=19 // pred_check_branch
          %371 = sbr.rel (%p369) target = $region28
        $region27: #{tpu_custom_call.1} parent=19 // pred_region
          %p372 = scmp.lt.s32.totalorder %s27, 5
          %s373 = scalar_select %p372, %s27, 5
          %s374 = smul.addr %s373, 2
          %s375 = smul.addr %s374, 8
          %s376 = scalar_lea.vmem %s1, %s375
        $region28: #{tpu_custom_call.1} parent=19 // pred_fallthru
          _
        // Predicated region
        $region29: #{tpu_custom_call.1} parent=19 // pred_check
          %p377 = pneg %p104
        $region30: #{tpu_custom_call.1} parent=19 // pred_check_branch
          %379 = sbr.rel (%p377) target = $region32
        $region31: #{tpu_custom_call.1} parent=19 // pred_region
          %p380 = scmp.lt.s32.totalorder %s27, 5
          %s381 = scalar_select %p380, %s27, 5
          %s382 = smul.addr %s381, 2
          %s383 = smul.addr %s382, 8
          %s384 = scalar_lea.vmem %s2, %s383
        $region32: #{tpu_custom_call.1} parent=19 // pred_fallthru
          _
        // Predicated region
        $region33: #{tpu_custom_call.1} parent=19 // pred_check
          %p385 = pneg %p130
        $region34: #{tpu_custom_call.1} parent=19 // pred_check_branch
          %387 = sbr.rel (%p385) target = $region36
        $region35: #{tpu_custom_call.1} parent=19 // pred_region
          %p388 = scmp.lt.s32.totalorder %s28, 7
          %s389 = scalar_select %p388, %s28, 7
          %s390 = smul.addr %s389, 16
          %s391 = smul.addr %s390, 8
          %s392 = scalar_lea.vmem %s3, %s391
        $region36: #{tpu_custom_call.1} parent=19 // pred_fallthru
          _
        // Predicated region
        $region37: #{tpu_custom_call.1} parent=19 // pred_check
          %p393 = pneg %p156
        $region38: #{tpu_custom_call.1} parent=19 // pred_check_branch
          %395 = sbr.rel (%p393) target = $region40
        $region39: #{tpu_custom_call.1} parent=19 // pred_region
          %p396 = scmp.lt.s32.totalorder %s28, 7
          %s397 = scalar_select %p396, %s28, 7
          %s398 = scalar_lea.vmem %s4, %s397
        $region40: #{tpu_custom_call.1} parent=19 // pred_fallthru
          _
        // Predicated region
        $region41: #{tpu_custom_call.1} parent=19 // pred_check
          %p399 = pneg %p182
        $region42: #{tpu_custom_call.1} parent=19 // pred_check_branch
          %401 = sbr.rel (%p399) target = $region44
        $region43: #{tpu_custom_call.1} parent=19 // pred_region
          %p402 = scmp.lt.s32.totalorder %s28, 7
          %s403 = scalar_select %p402, %s28, 7
          %s404 = smul.addr %s403, 16
          %s405 = smul.addr %s404, 8
          %s406 = scalar_lea.vmem %s5, %s405
        $region44: #{tpu_custom_call.1} parent=19 // pred_fallthru
          _
        // Predicated region
        $region45: #{tpu_custom_call.1} parent=19 // pred_check
          %p407 = pneg %p208
        $region46: #{tpu_custom_call.1} parent=19 // pred_check_branch
          %409 = sbr.rel (%p407) target = $region48
        $region47: #{tpu_custom_call.1} parent=19 // pred_region
          %p410 = scmp.lt.s32.totalorder %s28, 7
          %s411 = scalar_select %p410, %s28, 7
          %s412 = scalar_lea.vmem %s6, %s411
        $region48: #{tpu_custom_call.1} parent=19 // pred_fallthru
          _
        // Predicated region
        $region49: #{tpu_custom_call.1} parent=19 // pred_check
          %p413 = pneg %p234
        $region50: #{tpu_custom_call.1} parent=19 // pred_check_branch
          %415 = sbr.rel (%p413) target = $region52
        $region51: #{tpu_custom_call.1} parent=19 // pred_region
          %p416 = scmp.lt.s32.totalorder %s28, 7
          %s417 = scalar_select %p416, %s28, 7
          %s418 = smul.addr %s417, 16
          %s419 = smul.addr %s418, 8
          %s420 = scalar_lea.vmem %s7, %s419
        $region52: #{tpu_custom_call.1} parent=19 // pred_fallthru
          _
        // Predicated region
        $region53: #{tpu_custom_call.1} parent=19 // pred_check
          %p421 = pneg %p260
        $region54: #{tpu_custom_call.1} parent=19 // pred_check_branch
          %423 = sbr.rel (%p421) target = $region56
        $region55: #{tpu_custom_call.1} parent=19 // pred_region
          %p424 = scmp.lt.s32.totalorder %s28, 7
          %s425 = scalar_select %p424, %s28, 7
          %s426 = scalar_lea.vmem %s8, %s425
        $region56: #{tpu_custom_call.1} parent=19 // pred_fallthru
          _
        // Predicated region
        $region57: #{tpu_custom_call.1} parent=19 // pred_check
          %p427 = pneg %p286
        $region58: #{tpu_custom_call.1} parent=19 // pred_check_branch
          %429 = sbr.rel (%p427) target = $region60
        $region59: #{tpu_custom_call.1} parent=19 // pred_region
          %p430 = scmp.lt.s32.totalorder %s28, 7
          %s431 = scalar_select %p430, %s28, 7
          %s432 = smul.addr %s431, 2
          %s433 = smul.addr %s432, 8
          %s434 = scalar_lea.vmem %s9, %s433
        $region60: #{tpu_custom_call.1} parent=19 // pred_fallthru
          _
      $region20: #{tpu_custom_call.1} parent=5 // pred_fallthru
        _
      %p435 = scmp.le.s32.totalorder 1, %s20
      %p436 = scmp.lt.s32.totalorder %s20, 49
      %p437 = pnand %p435, %p436
      %p438 = pneg %p437
      // Predicated region
      $region61: #{tpu_custom_call.1} parent=5 // pred_check
        _
      $region62: #{tpu_custom_call.1} parent=5 // pred_check_branch
        %440 = sbr.rel (%p437) target = $region64
      $region63: #{tpu_custom_call.1} parent=5 // pred_region
        %s441 = ssub.s32 %s20, 1
        %p442 = scmp.lt.s32.totalorder %s29, 5
        %s443 = scalar_select %p442, %s29, 5
        %s444 = smul.addr %s443, 2
        %s445 = smul.addr %s444, 8
        %s446 = scalar_lea.vmem %s0, %s445
        %p447 = pneg %p58
        %p448 = pneg %p55
        %p449 = scmp.lt.s32.totalorder %s29, 5
        %s450 = scalar_select %p449, %s29, 5
        %s451 = smul.addr %s450, 2
        %s452 = smul.addr %s451, 8
        %s453 = scalar_lea.vmem %s1, %s452
        %p454 = pneg %p84
        %p455 = pneg %p81
        %p456 = scmp.lt.s32.totalorder %s29, 5
        %s457 = scalar_select %p456, %s29, 5
        %s458 = smul.addr %s457, 2
        %s459 = smul.addr %s458, 8
        %s460 = scalar_lea.vmem %s2, %s459
        %p461 = pneg %p110
        %p462 = pneg %p107
        %p463 = scmp.lt.s32.totalorder %s30, 7
        %s464 = scalar_select %p463, %s30, 7
        %s465 = smul.addr %s464, 16
        %s466 = smul.addr %s465, 8
        %s467 = scalar_lea.vmem %s3, %s466
        %p468 = pneg %p136
        %p469 = pneg %p133
        %p470 = scmp.lt.s32.totalorder %s30, 7
        %s471 = scalar_select %p470, %s30, 7
        %s472 = scalar_lea.vmem %s4, %s471
        %p473 = pneg %p162
        %p474 = pneg %p159
        %p475 = scmp.lt.s32.totalorder %s30, 7
        %s476 = scalar_select %p475, %s30, 7
        %s477 = smul.addr %s476, 16
        %s478 = smul.addr %s477, 8
        %s479 = scalar_lea.vmem %s5, %s478
        %p480 = pneg %p188
        %p481 = pneg %p185
        %p482 = scmp.lt.s32.totalorder %s30, 7
        %s483 = scalar_select %p482, %s30, 7
        %s484 = scalar_lea.vmem %s6, %s483
        %p485 = pneg %p214
        %p486 = pneg %p211
        %p487 = scmp.lt.s32.totalorder %s30, 7
        %s488 = scalar_select %p487, %s30, 7
        %s489 = smul.addr %s488, 16
        %s490 = smul.addr %s489, 8
        %s491 = scalar_lea.vmem %s7, %s490
        %p492 = pneg %p240
        %p493 = pneg %p237
        %p494 = scmp.lt.s32.totalorder %s30, 7
        %s495 = scalar_select %p494, %s30, 7
        %s496 = scalar_lea.vmem %s8, %s495
        %p497 = pneg %p266
        %p498 = pneg %p263
        %p499 = scmp.lt.s32.totalorder %s30, 7
        %s500 = scalar_select %p499, %s30, 7
        %s501 = smul.addr %s500, 2
        %s502 = smul.addr %s501, 8
        %s503 = scalar_lea.vmem %s9, %s502
        %p504 = pneg %p292
        %p505 = pneg %p289
        %p506 = pneg %p313
        %p507 = pneg %p310
        %p508 = pneg %p339
        %p509 = pneg %p336
        %s510 = sand.u32 %s326, 1
        %s511 = scalar_lea.sflag [#allocation4], %s510
        %s512 = sand.u32 %s326, 1
        %s513 = smul.addr %s512, 16
        %s514 = scalar_lea.vmem [#allocation3], %s513
        %p515 = scmp.lt.s32.totalorder %s29, 5
        %s516 = scalar_select %p515, %s29, 5
        %s517 = smul.addr %s516, 2
        %s518 = smul.addr %s517, 8
        %s519 = scalar_lea.vmem %s0, %s518
        %p520 = scmp.lt.s32.totalorder %s29, 5
        %s521 = scalar_select %p520, %s29, 5
        %s522 = smul.addr %s521, 2
        %s523 = smul.addr %s522, 8
        %s524 = scalar_lea.vmem %s1, %s523
        %p525 = scmp.lt.s32.totalorder %s29, 5
        %s526 = scalar_select %p525, %s29, 5
        %s527 = smul.addr %s526, 2
        %s528 = smul.addr %s527, 8
        %s529 = scalar_lea.vmem %s2, %s528
        %p530 = scmp.lt.s32.totalorder %s30, 7
        %s531 = scalar_select %p530, %s30, 7
        %s532 = smul.addr %s531, 16
        %s533 = smul.addr %s532, 8
        %s534 = scalar_lea.vmem %s3, %s533
        %p535 = scmp.lt.s32.totalorder %s30, 7
        %s536 = scalar_select %p535, %s30, 7
        %s537 = scalar_lea.vmem %s4, %s536
        %p538 = scmp.lt.s32.totalorder %s30, 7
        %s539 = scalar_select %p538, %s30, 7
        %s540 = smul.addr %s539, 16
        %s541 = smul.addr %s540, 8
        %s542 = scalar_lea.vmem %s5, %s541
        %p543 = scmp.lt.s32.totalorder %s30, 7
        %s544 = scalar_select %p543, %s30, 7
        %s545 = scalar_lea.vmem %s6, %s544
        %p546 = scmp.lt.s32.totalorder %s30, 7
        %s547 = scalar_select %p546, %s30, 7
        %s548 = smul.addr %s547, 16
        %s549 = smul.addr %s548, 8
        %s550 = scalar_lea.vmem %s7, %s549
        %p551 = scmp.lt.s32.totalorder %s30, 7
        %s552 = scalar_select %p551, %s30, 7
        %s553 = scalar_lea.vmem %s8, %s552
        %p554 = scmp.lt.s32.totalorder %s30, 7
        %s555 = scalar_select %p554, %s30, 7
        %s556 = smul.addr %s555, 2
        %s557 = smul.addr %s556, 8
        %s558 = scalar_lea.vmem %s9, %s557
        %p559 = scmp.eq.s32.totalorder %s30, 0
        // Predicated region
        $region65: #{tpu_custom_call.1} parent=63 // pred_check
          %p560 = pneg %p559
        $region66: #{tpu_custom_call.1} parent=63 // pred_check_branch
          %562 = sbr.rel (%p560) target = $region68
        $region67: #{tpu_custom_call.1} parent=63 // pred_region
          %563 = vst [vmem:[#allocation2] sm:$0xff] 0.0
          %564 = vst [vmem:[#allocation2 + $0x8] sm:$0xff] 0.0
        $region68: #{tpu_custom_call.1} parent=63 // pred_fallthru
          _
        %v565 = vld [vmem:[%s519] sm:$0xff]
        %v566 = vld [vmem:[%s519 + $0x8] sm:$0xff]
        %v567 = vld [vmem:[%s524] sm:$0xff]
        %v568 = vld [vmem:[%s524 + $0x8] sm:$0xff]
        %v569 = vld [vmem:[%s529] sm:$0xff]
        %v570 = vld [vmem:[%s529 + $0x8] sm:$0xff]
        %v571 = vld [vmem:[%s534] sm:$0xff]
        %v572 = vld [vmem:[%s534 + $0x8] sm:$0xff]
        %v573 = vld [vmem:[%s534 + $0x10] sm:$0xff]
        %v574 = vld [vmem:[%s534 + $0x18] sm:$0xff]
        %v575 = vld [vmem:[%s534 + $0x20] sm:$0xff]
        %v576 = vld [vmem:[%s534 + $0x28] sm:$0xff]
        %v577 = vld [vmem:[%s534 + $0x30] sm:$0xff]
        %v578 = vld [vmem:[%s534 + $0x38] sm:$0xff]
        %v579 = vld [vmem:[%s534 + $0x40] sm:$0xff]
        %v580 = vld [vmem:[%s534 + $0x48] sm:$0xff]
        %v581 = vld [vmem:[%s534 + $0x50] sm:$0xff]
        %v582 = vld [vmem:[%s534 + $0x58] sm:$0xff]
        %v583 = vld [vmem:[%s534 + $0x60] sm:$0xff]
        %v584 = vld [vmem:[%s534 + $0x68] sm:$0xff]
        %v585 = vld [vmem:[%s534 + $0x70] sm:$0xff]
        %v586 = vld [vmem:[%s534 + $0x78] sm:$0xff]
        %v587 = vld [vmem:[%s537] sm:$0x1]
        %v589 = vlaneseq
        %v590 = vshrl.u32 %v589, 7
        %v591 = vsub.s32 0, %v590
        %v592 = vrot.slane %v587, %v591
        %594 = vmatprep.subr.mxu0 0.0
        %595 = vmatpush1.msra.mxu0 %v571
        %596 = vmatprep.subr.mxu0 0.0
        %597 = vmatpush1.msra.mxu0 %v572
        %598 = vmatprep.subr.mxu0 0.0
        %599 = vmatpush1.msra.mxu0 %v573
        %600 = vmatprep.subr.mxu0 0.0
        %601 = vmatpush1.msra.mxu0 %v574
        %602 = vmatprep.subr.mxu0 0.0
        %603 = vmatpush1.msra.mxu0 %v575
        %604 = vmatprep.subr.mxu0 0.0
        %605 = vmatpush1.msra.mxu0 %v576
        %606 = vmatprep.subr.mxu0 0.0
        %607 = vmatpush1.msra.mxu0 %v577
        %608 = vmatprep.subr.mxu0 0.0
        %609 = vmatpush1.msra.mxu0 %v578
        %610 = vmatprep.subr.mxu0 0.0
        %611 = vmatpush1.msra.mxu0 %v579
        %612 = vmatprep.subr.mxu0 0.0
        %613 = vmatpush1.msra.mxu0 %v580
        %614 = vmatprep.subr.mxu0 0.0
        %615 = vmatpush1.msra.mxu0 %v581
        %616 = vmatprep.subr.mxu0 0.0
        %617 = vmatpush1.msra.mxu0 %v582
        %618 = vmatprep.subr.mxu0 0.0
        %619 = vmatpush1.msra.mxu0 %v583
        %620 = vmatprep.subr.mxu0 0.0
        %621 = vmatpush1.msra.mxu0 %v584
        %622 = vmatprep.subr.mxu0 0.0
        %623 = vmatpush1.msra.mxu0 %v585
        %624 = vmatprep.subr.mxu0 0.0
        %625 = vmatpush1.msra.mxu0 %v586
        %626 = vmatprep.subr.mxu0 0.0
        %627 = vmatpush1.msra.mxu0 0.0
        %628 = vmatprep.subr.mxu0 0.0
        %629 = vmatpush1.msra.mxu0 0.0
        %630 = vmatprep.subr.mxu0 0.0
        %631 = vmatpush1.msra.mxu0 0.0
        %632 = vmatprep.subr.mxu0 0.0
        %633 = vmatpush1.msra.mxu0 0.0
        %634 = vmatprep.subr.mxu0 0.0
        %635 = vmatpush1.msra.mxu0 0.0
        %636 = vmatprep.subr.mxu0 0.0
        %637 = vmatpush1.msra.mxu0 0.0
        %638 = vmatprep.subr.mxu0 0.0
        %639 = vmatpush1.msra.mxu0 0.0
        %640 = vmatprep.subr.mxu0 0.0
        %641 = vmatpush1.msra.mxu0 0.0
        %642 = vmatprep.subr.mxu0 0.0
        %643 = vmatpush1.msra.mxu0 0.0
        %644 = vmatprep.subr.mxu0 0.0
        %645 = vmatpush1.msra.mxu0 0.0
        %646 = vmatprep.subr.mxu0 0.0
        %647 = vmatpush1.msra.mxu0 0.0
        %648 = vmatprep.subr.mxu0 0.0
        %649 = vmatpush1.msra.mxu0 0.0
        %650 = vmatprep.subr.mxu0 0.0
        %651 = vmatpush1.msra.mxu0 0.0
        %652 = vmatprep.subr.mxu0 0.0
        %653 = vmatpush1.msra.mxu0 0.0
        %654 = vmatprep.subr.mxu0 0.0
        %655 = vmatpush1.msra.mxu0 0.0
        %656 = vmatprep.subr.mxu0 0.0
        %657 = vmatpush1.msra.mxu0 0.0
        %658 = vmatprep.mubr.f32.mxu0 0.0
        %659 = vmatmul.mubr.f32.gmra.mrb[0].mxu0 %v565
        %v660 = vpop.f32.mrb[0].mxu0
        %v661 = vadd.f32 %v592, %v660
        %v662 = vpop.f32.mrb[0].mxu0
        %663 = vmatprep.mubr.f32.mxu0 0.0
        %664 = vmatmul.mubr.f32.gmra.mrb[0].mxu0 %v566
        %v665 = vpop.f32.mrb[0].mxu0
        %v666 = vadd.f32 %v592, %v665
        %v667 = vpop.f32.mrb[0].mxu0
        %668 = vdwg.mxu0
        %v669 = vld [vmem:[%s542] sm:$0xff]
        %v670 = vld [vmem:[%s542 + $0x8] sm:$0xff]
        %v671 = vld [vmem:[%s542 + $0x10] sm:$0xff]
        %v672 = vld [vmem:[%s542 + $0x18] sm:$0xff]
        %v673 = vld [vmem:[%s542 + $0x20] sm:$0xff]
        %v674 = vld [vmem:[%s542 + $0x28] sm:$0xff]
        %v675 = vld [vmem:[%s542 + $0x30] sm:$0xff]
        %v676 = vld [vmem:[%s542 + $0x38] sm:$0xff]
        %v677 = vld [vmem:[%s542 + $0x40] sm:$0xff]
        %v678 = vld [vmem:[%s542 + $0x48] sm:$0xff]
        %v679 = vld [vmem:[%s542 + $0x50] sm:$0xff]
        %v680 = vld [vmem:[%s542 + $0x58] sm:$0xff]
        %v681 = vld [vmem:[%s542 + $0x60] sm:$0xff]
        %v682 = vld [vmem:[%s542 + $0x68] sm:$0xff]
        %v683 = vld [vmem:[%s542 + $0x70] sm:$0xff]
        %v684 = vld [vmem:[%s542 + $0x78] sm:$0xff]
        %v685 = vld [vmem:[%s545] sm:$0x1]
        %v687 = vlaneseq
        %v688 = vshrl.u32 %v687, 7
        %v689 = vsub.s32 0, %v688
        %v690 = vrot.slane %v685, %v689
        %692 = vmatprep.subr.mxu0 0.0
        %693 = vmatpush1.msra.mxu0 %v669
        %694 = vmatprep.subr.mxu0 0.0
        %695 = vmatpush1.msra.mxu0 %v670
        %696 = vmatprep.subr.mxu0 0.0
        %697 = vmatpush1.msra.mxu0 %v671
        %698 = vmatprep.subr.mxu0 0.0
        %699 = vmatpush1.msra.mxu0 %v672
        %700 = vmatprep.subr.mxu0 0.0
        %701 = vmatpush1.msra.mxu0 %v673
        %702 = vmatprep.subr.mxu0 0.0
        %703 = vmatpush1.msra.mxu0 %v674
        %704 = vmatprep.subr.mxu0 0.0
        %705 = vmatpush1.msra.mxu0 %v675
        %706 = vmatprep.subr.mxu0 0.0
        %707 = vmatpush1.msra.mxu0 %v676
        %708 = vmatprep.subr.mxu0 0.0
        %709 = vmatpush1.msra.mxu0 %v677
        %710 = vmatprep.subr.mxu0 0.0
        %711 = vmatpush1.msra.mxu0 %v678
        %712 = vmatprep.subr.mxu0 0.0
        %713 = vmatpush1.msra.mxu0 %v679
        %714 = vmatprep.subr.mxu0 0.0
        %715 = vmatpush1.msra.mxu0 %v680
        %716 = vmatprep.subr.mxu0 0.0
        %717 = vmatpush1.msra.mxu0 %v681
        %718 = vmatprep.subr.mxu0 0.0
        %719 = vmatpush1.msra.mxu0 %v682
        %720 = vmatprep.subr.mxu0 0.0
        %721 = vmatpush1.msra.mxu0 %v683
        %722 = vmatprep.subr.mxu0 0.0
        %723 = vmatpush1.msra.mxu0 %v684
        %724 = vmatprep.subr.mxu0 0.0
        %725 = vmatpush1.msra.mxu0 0.0
        %726 = vmatprep.subr.mxu0 0.0
        %727 = vmatpush1.msra.mxu0 0.0
        %728 = vmatprep.subr.mxu0 0.0
        %729 = vmatpush1.msra.mxu0 0.0
        %730 = vmatprep.subr.mxu0 0.0
        %731 = vmatpush1.msra.mxu0 0.0
        %732 = vmatprep.subr.mxu0 0.0
        %733 = vmatpush1.msra.mxu0 0.0
        %734 = vmatprep.subr.mxu0 0.0
        %735 = vmatpush1.msra.mxu0 0.0
        %736 = vmatprep.subr.mxu0 0.0
        %737 = vmatpush1.msra.mxu0 0.0
        %738 = vmatprep.subr.mxu0 0.0
        %739 = vmatpush1.msra.mxu0 0.0
        %740 = vmatprep.subr.mxu0 0.0
        %741 = vmatpush1.msra.mxu0 0.0
        %742 = vmatprep.subr.mxu0 0.0
        %743 = vmatpush1.msra.mxu0 0.0
        %744 = vmatprep.subr.mxu0 0.0
        %745 = vmatpush1.msra.mxu0 0.0
        %746 = vmatprep.subr.mxu0 0.0
        %747 = vmatpush1.msra.mxu0 0.0
        %748 = vmatprep.subr.mxu0 0.0
        %749 = vmatpush1.msra.mxu0 0.0
        %750 = vmatprep.subr.mxu0 0.0
        %751 = vmatpush1.msra.mxu0 0.0
        %752 = vmatprep.subr.mxu0 0.0
        %753 = vmatpush1.msra.mxu0 0.0
        %754 = vmatprep.subr.mxu0 0.0
        %755 = vmatpush1.msra.mxu0 0.0
        %756 = vmatprep.mubr.f32.mxu0 0.0
        %757 = vmatmul.mubr.f32.gmra.mrb[0].mxu0 %v567
        %v758 = vpop.f32.mrb[0].mxu0
        %v759 = vadd.f32 %v690, %v758
        %v760 = vpop.f32.mrb[0].mxu0
        %761 = vmatprep.mubr.f32.mxu0 0.0
        %762 = vmatmul.mubr.f32.gmra.mrb[0].mxu0 %v568
        %v763 = vpop.f32.mrb[0].mxu0
        %v764 = vadd.f32 %v690, %v763
        %v765 = vpop.f32.mrb[0].mxu0
        %766 = vdwg.mxu0
        %v767 = vld [vmem:[%s550] sm:$0xff]
        %v768 = vld [vmem:[%s550 + $0x8] sm:$0xff]
        %v769 = vld [vmem:[%s550 + $0x10] sm:$0xff]
        %v770 = vld [vmem:[%s550 + $0x18] sm:$0xff]
        %v771 = vld [vmem:[%s550 + $0x20] sm:$0xff]
        %v772 = vld [vmem:[%s550 + $0x28] sm:$0xff]
        %v773 = vld [vmem:[%s550 + $0x30] sm:$0xff]
        %v774 = vld [vmem:[%s550 + $0x38] sm:$0xff]
        %v775 = vld [vmem:[%s550 + $0x40] sm:$0xff]
        %v776 = vld [vmem:[%s550 + $0x48] sm:$0xff]
        %v777 = vld [vmem:[%s550 + $0x50] sm:$0xff]
        %v778 = vld [vmem:[%s550 + $0x58] sm:$0xff]
        %v779 = vld [vmem:[%s550 + $0x60] sm:$0xff]
        %v780 = vld [vmem:[%s550 + $0x68] sm:$0xff]
        %v781 = vld [vmem:[%s550 + $0x70] sm:$0xff]
        %v782 = vld [vmem:[%s550 + $0x78] sm:$0xff]
        %v783 = vld [vmem:[%s553] sm:$0x1]
        %v785 = vlaneseq
        %v786 = vshrl.u32 %v785, 7
        %v787 = vsub.s32 0, %v786
        %v788 = vrot.slane %v783, %v787
        %790 = vmatprep.subr.mxu0 0.0
        %791 = vmatpush1.msra.mxu0 %v767
        %792 = vmatprep.subr.mxu0 0.0
        %793 = vmatpush1.msra.mxu0 %v768
        %794 = vmatprep.subr.mxu0 0.0
        %795 = vmatpush1.msra.mxu0 %v769
        %796 = vmatprep.subr.mxu0 0.0
        %797 = vmatpush1.msra.mxu0 %v770
        %798 = vmatprep.subr.mxu0 0.0
        %799 = vmatpush1.msra.mxu0 %v771
        %800 = vmatprep.subr.mxu0 0.0
        %801 = vmatpush1.msra.mxu0 %v772
        %802 = vmatprep.subr.mxu0 0.0
        %803 = vmatpush1.msra.mxu0 %v773
        %804 = vmatprep.subr.mxu0 0.0
        %805 = vmatpush1.msra.mxu0 %v774
        %806 = vmatprep.subr.mxu0 0.0
        %807 = vmatpush1.msra.mxu0 %v775
        %808 = vmatprep.subr.mxu0 0.0
        %809 = vmatpush1.msra.mxu0 %v776
        %810 = vmatprep.subr.mxu0 0.0
        %811 = vmatpush1.msra.mxu0 %v777
        %812 = vmatprep.subr.mxu0 0.0
        %813 = vmatpush1.msra.mxu0 %v778
        %814 = vmatprep.subr.mxu0 0.0
        %815 = vmatpush1.msra.mxu0 %v779
        %816 = vmatprep.subr.mxu0 0.0
        %817 = vmatpush1.msra.mxu0 %v780
        %818 = vmatprep.subr.mxu0 0.0
        %819 = vmatpush1.msra.mxu0 %v781
        %820 = vmatprep.subr.mxu0 0.0
        %821 = vmatpush1.msra.mxu0 %v782
        %822 = vmatprep.subr.mxu0 0.0
        %823 = vmatpush1.msra.mxu0 0.0
        %824 = vmatprep.subr.mxu0 0.0
        %825 = vmatpush1.msra.mxu0 0.0
        %826 = vmatprep.subr.mxu0 0.0
        %827 = vmatpush1.msra.mxu0 0.0
        %828 = vmatprep.subr.mxu0 0.0
        %829 = vmatpush1.msra.mxu0 0.0
        %830 = vmatprep.subr.mxu0 0.0
        %831 = vmatpush1.msra.mxu0 0.0
        %832 = vmatprep.subr.mxu0 0.0
        %833 = vmatpush1.msra.mxu0 0.0
        %834 = vmatprep.subr.mxu0 0.0
        %835 = vmatpush1.msra.mxu0 0.0
        %836 = vmatprep.subr.mxu0 0.0
        %837 = vmatpush1.msra.mxu0 0.0
        %838 = vmatprep.subr.mxu0 0.0
        %839 = vmatpush1.msra.mxu0 0.0
        %840 = vmatprep.subr.mxu0 0.0
        %841 = vmatpush1.msra.mxu0 0.0
        %842 = vmatprep.subr.mxu0 0.0
        %843 = vmatpush1.msra.mxu0 0.0
        %844 = vmatprep.subr.mxu0 0.0
        %845 = vmatpush1.msra.mxu0 0.0
        %846 = vmatprep.subr.mxu0 0.0
        %847 = vmatpush1.msra.mxu0 0.0
        %848 = vmatprep.subr.mxu0 0.0
        %849 = vmatpush1.msra.mxu0 0.0
        %850 = vmatprep.subr.mxu0 0.0
        %851 = vmatpush1.msra.mxu0 0.0
        %852 = vmatprep.subr.mxu0 0.0
        %853 = vmatpush1.msra.mxu0 0.0
        %854 = vmatprep.mubr.f32.mxu0 0.0
        %855 = vmatmul.mubr.f32.gmra.mrb[0].mxu0 %v569
        %v856 = vpop.f32.mrb[0].mxu0
        %v857 = vadd.f32 %v788, %v856
        %v858 = vpop.f32.mrb[0].mxu0
        %859 = vmatprep.mubr.f32.mxu0 0.0
        %860 = vmatmul.mubr.f32.gmra.mrb[0].mxu0 %v570
        %v861 = vpop.f32.mrb[0].mxu0
        %v862 = vadd.f32 %v788, %v861
        %v863 = vpop.f32.mrb[0].mxu0
        %864 = vdwg.mxu0
        %vm865 = vcmask 130048
        %v867 = vsel %vm865, %v661, 0
        %v870 = vsel %vm865, %v666, 0
        %v873 = vsel %vm865, %v759, 0
        %v876 = vsel %vm865, %v764, 0
        %878 = vmatprep.subr.mxu0 0.0
        %879 = vmatpush1.xpose.msra.mxu0 %v873
        %880 = vmatprep.subr.mxu0 0.0
        %881 = vmatpush1.xpose.msra.mxu0 %v876
        %882 = vmatprep.subr.mxu0 0.0
        %883 = vmatpush1.xpose.msra.mxu0 0.0
        %884 = vmatprep.subr.mxu0 0.0
        %885 = vmatpush1.xpose.msra.mxu0 0.0
        %886 = vmatprep.subr.mxu0 0.0
        %887 = vmatpush1.xpose.msra.mxu0 0.0
        %888 = vmatprep.subr.mxu0 0.0
        %889 = vmatpush1.xpose.msra.mxu0 0.0
        %890 = vmatprep.subr.mxu0 0.0
        %891 = vmatpush1.xpose.msra.mxu0 0.0
        %892 = vmatprep.subr.mxu0 0.0
        %893 = vmatpush1.xpose.msra.mxu0 0.0
        %894 = vmatprep.subr.mxu0 0.0
        %895 = vmatpush1.xpose.msra.mxu0 0.0
        %896 = vmatprep.subr.mxu0 0.0
        %897 = vmatpush1.xpose.msra.mxu0 0.0
        %898 = vmatprep.subr.mxu0 0.0
        %899 = vmatpush1.xpose.msra.mxu0 0.0
        %900 = vmatprep.subr.mxu0 0.0
        %901 = vmatpush1.xpose.msra.mxu0 0.0
        %902 = vmatprep.subr.mxu0 0.0
        %903 = vmatpush1.xpose.msra.mxu0 0.0
        %904 = vmatprep.subr.mxu0 0.0
        %905 = vmatpush1.xpose.msra.mxu0 0.0
        %906 = vmatprep.subr.mxu0 0.0
        %907 = vmatpush1.xpose.msra.mxu0 0.0
        %908 = vmatprep.subr.mxu0 0.0
        %909 = vmatpush1.xpose.msra.mxu0 0.0
        %910 = vmatprep.subr.mxu0 0.0
        %911 = vmatpush1.xpose.msra.mxu0 0.0
        %912 = vmatprep.subr.mxu0 0.0
        %913 = vmatpush1.xpose.msra.mxu0 0.0
        %914 = vmatprep.subr.mxu0 0.0
        %915 = vmatpush1.xpose.msra.mxu0 0.0
        %916 = vmatprep.subr.mxu0 0.0
        %917 = vmatpush1.xpose.msra.mxu0 0.0
        %918 = vmatprep.subr.mxu0 0.0
        %919 = vmatpush1.xpose.msra.mxu0 0.0
        %920 = vmatprep.subr.mxu0 0.0
        %921 = vmatpush1.xpose.msra.mxu0 0.0
        %922 = vmatprep.subr.mxu0 0.0
        %923 = vmatpush1.xpose.msra.mxu0 0.0
        %924 = vmatprep.subr.mxu0 0.0
        %925 = vmatpush1.xpose.msra.mxu0 0.0
        %926 = vmatprep.subr.mxu0 0.0
        %927 = vmatpush1.xpose.msra.mxu0 0.0
        %928 = vmatprep.subr.mxu0 0.0
        %929 = vmatpush1.xpose.msra.mxu0 0.0
        %930 = vmatprep.subr.mxu0 0.0
        %931 = vmatpush1.xpose.msra.mxu0 0.0
        %932 = vmatprep.subr.mxu0 0.0
        %933 = vmatpush1.xpose.msra.mxu0 0.0
        %934 = vmatprep.subr.mxu0 0.0
        %935 = vmatpush1.xpose.msra.mxu0 0.0
        %936 = vmatprep.subr.mxu0 0.0
        %937 = vmatpush1.xpose.msra.mxu0 0.0
        %938 = vmatprep.subr.mxu0 0.0
        %939 = vmatpush1.xpose.msra.mxu0 0.0
        %940 = vmatprep.subr.mxu0 0.0
        %941 = vmatpush1.xpose.msra.mxu0 0.0
        %942 = vmatprep.mubr.f32.mxu0 0.0
        %943 = vmatmul.mubr.f32.gmra.mrb[0].mxu0 %v867
        %v944 = vpop.f32.mrb[0].mxu0
        %v945 = vadd.f32 0.0, %v944
        %v946 = vpop.f32.mrb[0].mxu0
        %947 = vmatprep.mubr.f32.mxu0 0.0
        %948 = vmatmul.mubr.f32.gmra.mrb[0].mxu0 %v870
        %v949 = vpop.f32.mrb[0].mxu0
        %v950 = vadd.f32 0.0, %v949
        %v951 = vpop.f32.mrb[0].mxu0
        %952 = vdwg.mxu0
        %v953 = vmul.f32 %v945, 0.25
        %v954 = vmul.f32 %v950, 0.25
        %v955 = vsel %vm865, %v953, -inf
        %956 = vmax.xlane.f32.xlu0 %v955
        %v957 = vpop.xlane.xlu0 %956
        %v958 = vsel %vm865, %v954, -inf
        %959 = vmax.xlane.f32.xlu0 %v958
        %v960 = vpop.xlane.xlu0 %959
        %v961 = vsub.f32 %v953, %v957
        %v962 = vsub.f32 %v954, %v960
        %v963 = vmul.f32 %v961, 1.442695
        %v964 = vpow.pop %v963
        %v965 = vmul.f32 %v962, 1.442695
        %v966 = vpow.pop %v965
        %v967 = vsel %vm865, %v964, 0.0
        %968 = vadd.xlane.f32.xlu0 %v967
        %v969 = vpop.xlane.xlu0 %968
        %v970 = vsel %vm865, %v966, 0.0
        %971 = vadd.xlane.f32.xlu0 %v970
        %v972 = vpop.xlane.xlu0 %971
        %v973 = vrcp.pop %v969
        %v974 = vmul.f32 %v964, %v973
        %v975 = vrcp.pop %v972
        %v976 = vmul.f32 %v966, %v975
        %v978 = vsel %vm865, %v974, 0
        %v981 = vsel %vm865, %v976, 0
        %983 = vmatprep.subr.mxu0 0.0
        %984 = vmatpush1.msra.mxu0 %v857
        %985 = vmatprep.subr.mxu0 0.0
        %986 = vmatpush1.msra.mxu0 %v862
        %987 = vmatprep.subr.mxu0 0.0
        %988 = vmatpush1.msra.mxu0 0.0
        %989 = vmatprep.subr.mxu0 0.0
        %990 = vmatpush1.msra.mxu0 0.0
        %991 = vmatprep.subr.mxu0 0.0
        %992 = vmatpush1.msra.mxu0 0.0
        %993 = vmatprep.subr.mxu0 0.0
        %994 = vmatpush1.msra.mxu0 0.0
        %995 = vmatprep.subr.mxu0 0.0
        %996 = vmatpush1.msra.mxu0 0.0
        %997 = vmatprep.subr.mxu0 0.0
        %998 = vmatpush1.msra.mxu0 0.0
        %999 = vmatprep.subr.mxu0 0.0
        %1000 = vmatpush1.msra.mxu0 0.0
        %1001 = vmatprep.subr.mxu0 0.0
        %1002 = vmatpush1.msra.mxu0 0.0
        %1003 = vmatprep.subr.mxu0 0.0
        %1004 = vmatpush1.msra.mxu0 0.0
        %1005 = vmatprep.subr.mxu0 0.0
        %1006 = vmatpush1.msra.mxu0 0.0
        %1007 = vmatprep.subr.mxu0 0.0
        %1008 = vmatpush1.msra.mxu0 0.0
        %1009 = vmatprep.subr.mxu0 0.0
        %1010 = vmatpush1.msra.mxu0 0.0
        %1011 = vmatprep.subr.mxu0 0.0
        %1012 = vmatpush1.msra.mxu0 0.0
        %1013 = vmatprep.subr.mxu0 0.0
        %1014 = vmatpush1.msra.mxu0 0.0
        %1015 = vmatprep.subr.mxu0 0.0
        %1016 = vmatpush1.msra.mxu0 0.0
        %1017 = vmatprep.subr.mxu0 0.0
        %1018 = vmatpush1.msra.mxu0 0.0
        %1019 = vmatprep.subr.mxu0 0.0
        %1020 = vmatpush1.msra.mxu0 0.0
        %1021 = vmatprep.subr.mxu0 0.0
        %1022 = vmatpush1.msra.mxu0 0.0
        %1023 = vmatprep.subr.mxu0 0.0
        %1024 = vmatpush1.msra.mxu0 0.0
        %1025 = vmatprep.subr.mxu0 0.0
        %1026 = vmatpush1.msra.mxu0 0.0
        %1027 = vmatprep.subr.mxu0 0.0
        %1028 = vmatpush1.msra.mxu0 0.0
        %1029 = vmatprep.subr.mxu0 0.0
        %1030 = vmatpush1.msra.mxu0 0.0
        %1031 = vmatprep.subr.mxu0 0.0
        %1032 = vmatpush1.msra.mxu0 0.0
        %1033 = vmatprep.subr.mxu0 0.0
        %1034 = vmatpush1.msra.mxu0 0.0
        %1035 = vmatprep.subr.mxu0 0.0
        %1036 = vmatpush1.msra.mxu0 0.0
        %1037 = vmatprep.subr.mxu0 0.0
        %1038 = vmatpush1.msra.mxu0 0.0
        %1039 = vmatprep.subr.mxu0 0.0
        %1040 = vmatpush1.msra.mxu0 0.0
        %1041 = vmatprep.subr.mxu0 0.0
        %1042 = vmatpush1.msra.mxu0 0.0
        %1043 = vmatprep.subr.mxu0 0.0
        %1044 = vmatpush1.msra.mxu0 0.0
        %1045 = vmatprep.subr.mxu0 0.0
        %1046 = vmatpush1.msra.mxu0 0.0
        %1047 = vmatprep.mubr.f32.mxu0 0.0
        %1048 = vmatmul.mubr.f32.gmra.mrb[0].mxu0 %v978
        %v1049 = vpop.f32.mrb[0].mxu0
        %v1050 = vadd.f32 0.0, %v1049
        %v1051 = vpop.f32.mrb[0].mxu0
        %1052 = vmatprep.mubr.f32.mxu0 0.0
        %1053 = vmatmul.mubr.f32.gmra.mrb[0].mxu0 %v981
        %v1054 = vpop.f32.mrb[0].mxu0
        %v1055 = vadd.f32 0.0, %v1054
        %v1056 = vpop.f32.mrb[0].mxu0
        %1057 = vdwg.mxu0
        %v1058 = vld [vmem:[#allocation2] sm:$0xff]
        %v1059 = vld [vmem:[#allocation2 + $0x8] sm:$0xff]
        %v1060 = vld [vmem:[%s558] sm:$0xff]
        %v1061 = vld [vmem:[%s558 + $0x8] sm:$0xff]
        %v1063 = vsel %vm865, %v1050, 0
        %v1066 = vsel %vm865, %v1055, 0
        %1068 = vmatprep.subr.mxu0 0.0
        %1069 = vmatpush1.msra.mxu0 %v1060
        %1070 = vmatprep.subr.mxu0 0.0
        %1071 = vmatpush1.msra.mxu0 %v1061
        %1072 = vmatprep.subr.mxu0 0.0
        %1073 = vmatpush1.msra.mxu0 0.0
        %1074 = vmatprep.subr.mxu0 0.0
        %1075 = vmatpush1.msra.mxu0 0.0
        %1076 = vmatprep.subr.mxu0 0.0
        %1077 = vmatpush1.msra.mxu0 0.0
        %1078 = vmatprep.subr.mxu0 0.0
        %1079 = vmatpush1.msra.mxu0 0.0
        %1080 = vmatprep.subr.mxu0 0.0
        %1081 = vmatpush1.msra.mxu0 0.0
        %1082 = vmatprep.subr.mxu0 0.0
        %1083 = vmatpush1.msra.mxu0 0.0
        %1084 = vmatprep.subr.mxu0 0.0
        %1085 = vmatpush1.msra.mxu0 0.0
        %1086 = vmatprep.subr.mxu0 0.0
        %1087 = vmatpush1.msra.mxu0 0.0
        %1088 = vmatprep.subr.mxu0 0.0
        %1089 = vmatpush1.msra.mxu0 0.0
        %1090 = vmatprep.subr.mxu0 0.0
        %1091 = vmatpush1.msra.mxu0 0.0
        %1092 = vmatprep.subr.mxu0 0.0
        %1093 = vmatpush1.msra.mxu0 0.0
        %1094 = vmatprep.subr.mxu0 0.0
        %1095 = vmatpush1.msra.mxu0 0.0
        %1096 = vmatprep.subr.mxu0 0.0
        %1097 = vmatpush1.msra.mxu0 0.0
        %1098 = vmatprep.subr.mxu0 0.0
        %1099 = vmatpush1.msra.mxu0 0.0
        %1100 = vmatprep.subr.mxu0 0.0
        %1101 = vmatpush1.msra.mxu0 0.0
        %1102 = vmatprep.subr.mxu0 0.0
        %1103 = vmatpush1.msra.mxu0 0.0
        %1104 = vmatprep.subr.mxu0 0.0
        %1105 = vmatpush1.msra.mxu0 0.0
        %1106 = vmatprep.subr.mxu0 0.0
        %1107 = vmatpush1.msra.mxu0 0.0
        %1108 = vmatprep.subr.mxu0 0.0
        %1109 = vmatpush1.msra.mxu0 0.0
        %1110 = vmatprep.subr.mxu0 0.0
        %1111 = vmatpush1.msra.mxu0 0.0
        %1112 = vmatprep.subr.mxu0 0.0
        %1113 = vmatpush1.msra.mxu0 0.0
        %1114 = vmatprep.subr.mxu0 0.0
        %1115 = vmatpush1.msra.mxu0 0.0
        %1116 = vmatprep.subr.mxu0 0.0
        %1117 = vmatpush1.msra.mxu0 0.0
        %1118 = vmatprep.subr.mxu0 0.0
        %1119 = vmatpush1.msra.mxu0 0.0
        %1120 = vmatprep.subr.mxu0 0.0
        %1121 = vmatpush1.msra.mxu0 0.0
        %1122 = vmatprep.subr.mxu0 0.0
        %1123 = vmatpush1.msra.mxu0 0.0
        %1124 = vmatprep.subr.mxu0 0.0
        %1125 = vmatpush1.msra.mxu0 0.0
        %1126 = vmatprep.subr.mxu0 0.0
        %1127 = vmatpush1.msra.mxu0 0.0
        %1128 = vmatprep.subr.mxu0 0.0
        %1129 = vmatpush1.msra.mxu0 0.0
        %1130 = vmatprep.subr.mxu0 0.0
        %1131 = vmatpush1.msra.mxu0 0.0
        %1132 = vmatprep.mubr.f32.mxu0 0.0
        %1133 = vmatmul.mubr.f32.gmra.mrb[0].mxu0 %v1063
        %v1134 = vpop.f32.mrb[0].mxu0
        %v1135 = vadd.f32 0.0, %v1134
        %v1136 = vpop.f32.mrb[0].mxu0
        %1137 = vmatprep.mubr.f32.mxu0 0.0
        %1138 = vmatmul.mubr.f32.gmra.mrb[0].mxu0 %v1066
        %v1139 = vpop.f32.mrb[0].mxu0
        %v1140 = vadd.f32 0.0, %v1139
        %v1141 = vpop.f32.mrb[0].mxu0
        %1142 = vdwg.mxu0
        %v1143 = vadd.f32 %v1058, %v1135
        %v1144 = vadd.f32 %v1059, %v1140
        %1145 = vst [vmem:[#allocation2] sm:$0xff] %v1143
        %1146 = vst [vmem:[#allocation2 + $0x8] sm:$0xff] %v1144
        %p1147 = scmp.eq.s32.totalorder %s30, 7
        // Predicated region
        $region69: #{tpu_custom_call.1} parent=63 // pred_check
          %p1148 = pneg %p1147
        $region70: #{tpu_custom_call.1} parent=63 // pred_check_branch
          %1150 = sbr.rel (%p1148) target = $region72
        $region71: #{tpu_custom_call.1} parent=63 // pred_region
          %v1151 = vld [vmem:[#allocation2] sm:$0xff]
          %v1152 = vld [vmem:[#allocation2 + $0x8] sm:$0xff]
          %v1153 = vld [vmem:[%s10] sm:$0x1]
          %v1155 = vlaneseq
          %v1156 = vshrl.u32 %v1155, 7
          %v1157 = vsub.s32 0, %v1156
          %v1158 = vrot.slane %v1153, %v1157
          %v1160 = vadd.f32 %v1151, %v1158
          %v1161 = vadd.f32 %v1152, %v1158
          %1162 = vst [vmem:[%s514] sm:$0xff] %v1160
          %1163 = vst [vmem:[%s514 + $0x8] sm:$0xff] %v1161
        $region72: #{tpu_custom_call.1} parent=63 // pred_fallthru
          _
        %s1164 = sand.u32 %s326, 1
        %s1165 = scalar_lea.sflag [#allocation4], %s1164
        %s1166 = sand.u32 %s326, 1
        %s1167 = smul.addr %s1166, 16
        %s1168 = scalar_lea.vmem [#allocation3], %s1167
        // Predicated region
        $region73: #{tpu_custom_call.1} parent=63 // pred_check
          %p1169 = pneg %p336
        $region74: #{tpu_custom_call.1} parent=63 // pred_check_branch
          %1171 = sbr.rel (%p1169) target = $region76
        $region75: #{tpu_custom_call.1} parent=63 // pred_region
          %s1173 = ssub.s32 256, 256
          %1174 = vsyncadd %s1165, %s1173
          %s1175 = smul.addr %s29, 2
          %s1176 = smul.addr %s1175, 128
          %s1177 = scalar_lea.hbm %s11, %s1176
          %s1178 = sshll.u32 %s1168, 4
          %s1179 = int_to_ptr.vmem [resolvable:$true] %s1178
          %1184 = dma.vmem_to_hbm [thread:$0]  %s1179, 256, %s1177, %s1165, 128, 128, 8
        $region76: #{tpu_custom_call.1} parent=63 // pred_fallthru
          _
      $region64: #{tpu_custom_call.1} parent=5 // pred_fallthru
        _
      %p1185 = scmp.le.s32.totalorder 2, %s20
      // Predicated region
      $region77: #{tpu_custom_call.1} parent=5 // pred_check
        %p1186 = pneg %p1185
      $region78: #{tpu_custom_call.1} parent=5 // pred_check_branch
        %1188 = sbr.rel (%p1186) target = $region80
      $region79: #{tpu_custom_call.1} parent=5 // pred_region
        %s1189 = ssub.s32 %s20, 2
        // Predicated region
        $region81: #{tpu_custom_call.1} parent=79 // pred_check
          %p1190 = pneg %p342
        $region82: #{tpu_custom_call.1} parent=79 // pred_check_branch
          %1192 = sbr.rel (%p1190) target = $region84
        $region83: #{tpu_custom_call.1} parent=79 // pred_region
          %s1193 = sand.u32 %s327, 1
          %s1194 = scalar_lea.sflag [#allocation4], %s1193
          %s1195 = sand.u32 %s327, 1
          %s1196 = smul.addr %s1195, 16
          %s1197 = scalar_lea.vmem [#allocation3], %s1196
          %1198 = dma.done %s1194, 256
        $region84: #{tpu_custom_call.1} parent=79 // pred_fallthru
          _
      $region80: #{tpu_custom_call.1} parent=5 // pred_fallthru
        _
    $region6: #{tpu_custom_call.1} parent=1 // loop_footer
      %s24 = sadd.s32 1, %s20
    $region7: #{tpu_custom_call.1} parent=1 // loop_footer_branch
      %19 = sbr.rel target = $region3
    $region8: #{tpu_custom_call.1} parent=1 // loop_exit
      _
    %1199 = vsyncpa [#allocation4], 1
    %s1200 = scalar_lea.sflag [#allocation4], 1
    %1201 = vsyncpa %s1200, 1

</llo_original>
